<compile_context>
chip_gen: v5e
topology: v5e:2x2
jax: 0.10.0
libtpu: 0.0.40
codegen_flags: <defaults>
</compile_context>

<pallas_src>
import functools

import jax
import jax.numpy as jnp
from jax.experimental import pallas as pl
from jax.experimental.pallas import tpu as pltpu


def mlp_kernel(x_ref, w1_ref, b1_ref, w2_ref, b2_ref, w3_ref, b3_ref, o_ref):
    # Layer 1: Linear(D_in, 64) + ReLU
    h1 = jnp.dot(x_ref[...], w1_ref[...], preferred_element_type=jnp.float32)
    h1 = jnp.maximum(h1 + b1_ref[...], 0.0)
    # Layer 2: Linear(64, 128) + ReLU
    h2 = jnp.dot(h1, w2_ref[...], preferred_element_type=jnp.float32)
    h2 = jnp.maximum(h2 + b2_ref[...], 0.0)
    # Layer 3: Linear(128, n_actions_padded)  (lane-dense, padded to 128)
    out = jnp.dot(h2, w3_ref[...], preferred_element_type=jnp.float32)
    o_ref[...] = (out + b3_ref[...]).astype(o_ref.dtype)


def _round_up(x, m):
    return ((x + m - 1) // m) * m


def mlp_forward(x, params, *, tb=256):
    """Fused 3-layer MLP forward. x: (B, D_in) f32. Returns (B, n_actions) f32."""
    w1, b1, w2, b2, w3, b3 = params
    B, d_in = x.shape
    n_actions = w3.shape[1]

    # --- Lane-dense output: pad the final layer's output dim up to 128. ---
    n_pad = _round_up(n_actions, 128)
    if n_pad != n_actions:
        w3 = jnp.pad(w3, ((0, 0), (0, n_pad - n_actions)))
        b3 = jnp.pad(b3, ((0, 0), (0, n_pad - n_actions)))

    # --- Batch tile: big enough to fill MXU rows, multiple of 8 (sublanes). ---
    tb = min(tb, _round_up(B, 8))
    b_pad = _round_up(B, tb)
    if b_pad != B:
        x = jnp.pad(x, ((0, b_pad - B), (0, 0)))
    nb = b_pad // tb

    const = lambda i: (0, 0)  # weights/biases stay VMEM-resident across the grid

    out = pl.pallas_call(
        mlp_kernel,
        out_shape=jax.ShapeDtypeStruct((b_pad, n_pad), jnp.float32),
        grid=(nb,),
        in_specs=[
            pl.BlockSpec((tb, d_in), lambda i: (i, 0)),        # x tile streamed
            pl.BlockSpec(w1.shape, const),
            pl.BlockSpec(b1.shape, const),
            pl.BlockSpec(w2.shape, const),
            pl.BlockSpec(b2.shape, const),
            pl.BlockSpec(w3.shape, const),
            pl.BlockSpec(b3.shape, const),
        ],
        out_specs=pl.BlockSpec((tb, n_pad), lambda i: (i, 0)),
        compiler_params=pltpu.CompilerParams(
            dimension_semantics=("parallel",),                 # use both TCs on v7x
        ),
    )(x, w1, b1, w2, b2, w3, b3)

    return out[:B, :n_actions]


def init_params(key, input_shape, n_actions):
    # PyTorch init: weight ~ N(0, 0.01), bias = 0. Deterministic via PRNGKey.
    k1, k2, k3 = jax.random.split(key, 3)
    w1 = 0.01 * jax.random.normal(k1, (input_shape, 64), jnp.float32)
    b1 = jnp.zeros((1, 64), jnp.float32)
    w2 = 0.01 * jax.random.normal(k2, (64, 128), jnp.float32)
    b2 = jnp.zeros((1, 128), jnp.float32)
    w3 = 0.01 * jax.random.normal(k3, (128, n_actions), jnp.float32)
    b3 = jnp.zeros((1, n_actions), jnp.float32)
    return (w1, b1, w2, b2, w3, b3)


if __name__ == "__main__":
    key = jax.random.PRNGKey(0)
    kx, kp = jax.random.split(key)

    batch = 1024         # many rows per call: amortizes dispatch over the batch grid
    input_shape = 32     # feature dim of the knapsack state vector
    n_actions = 4

    x = jax.random.normal(kx, (batch, input_shape), jnp.float32)
    params = init_params(kp, input_shape, n_actions)

    fwd = jax.jit(functools.partial(mlp_forward, tb=256))
    out = fwd(x, params)
    out = jax.block_until_ready(out)

    # Pure-JAX reference check.
    w1, b1, w2, b2, w3, b3 = params
    ref = jnp.maximum(x @ w1 + b1, 0.0)
    ref = jnp.maximum(ref @ w2 + b2, 0.0)
    ref = ref @ w3 + b3
    assert out.shape == (batch, n_actions)
    assert jnp.allclose(out, ref, atol=1e-4, rtol=1e-4)

    # Also exercise a small / non-tile-multiple batch to confirm padding paths.
    x_small = x[:8]
    out_small = jax.block_until_ready(mlp_forward(x_small, params))
    assert out_small.shape == (8, n_actions)
    assert jnp.allclose(out_small, ref[:8], atol=1e-4, rtol=1e-4)

    print("KERNEL_OK")
</pallas_src>

<mosaic_0001>
module attributes {stable_mosaic.version = 11 : i64} {
  func.func @mlp_kernel(%arg0: i32, %arg1: memref<256x32xf32, #tpu.memory_space<vmem>>, %arg2: memref<32x64xf32, #tpu.memory_space<vmem>>, %arg3: memref<1x64xf32, #tpu.memory_space<vmem>>, %arg4: memref<64x128xf32, #tpu.memory_space<vmem>>, %arg5: memref<1x128xf32, #tpu.memory_space<vmem>>, %arg6: memref<128x128xf32, #tpu.memory_space<vmem>>, %arg7: memref<1x128xf32, #tpu.memory_space<vmem>>, %arg8: memref<256x128xf32, #tpu.memory_space<vmem>>) attributes {dimension_semantics = [#tpu.dimension_semantics<parallel>], iteration_bounds = array<i64: 4>, scalar_prefetch = 0 : i64, scratch_operands = 0 : i64, tpu.core_type = #tpu.core_type<tc>, window_params = [{transform_indices = @transform_0, window_bounds = array<i64: 256, 32>}, {pipeline_mode = #tpu.pipeline_mode<synchronous>, transform_indices = @transform_1, window_bounds = array<i64: 32, 64>}, {pipeline_mode = #tpu.pipeline_mode<synchronous>, transform_indices = @transform_2, window_bounds = array<i64: 1, 64>}, {pipeline_mode = #tpu.pipeline_mode<synchronous>, transform_indices = @transform_3, window_bounds = array<i64: 64, 128>}, {pipeline_mode = #tpu.pipeline_mode<synchronous>, transform_indices = @transform_4, window_bounds = array<i64: 1, 128>}, {pipeline_mode = #tpu.pipeline_mode<synchronous>, transform_indices = @transform_5, window_bounds = array<i64: 128, 128>}, {pipeline_mode = #tpu.pipeline_mode<synchronous>, transform_indices = @transform_6, window_bounds = array<i64: 1, 128>}, {transform_indices = @transform_7, window_bounds = array<i64: 256, 128>}]} {
    %c0 = arith.constant 0 : index
    %c0_0 = arith.constant 0 : index
    %0 = vector.load %arg1[%c0, %c0_0] : memref<256x32xf32, #tpu.memory_space<vmem>>, vector<256x32xf32>
    %c0_1 = arith.constant 0 : index
    %c0_2 = arith.constant 0 : index
    %1 = vector.load %arg2[%c0_1, %c0_2] : memref<32x64xf32, #tpu.memory_space<vmem>>, vector<32x64xf32>
    %cst = arith.constant dense<0.000000e+00> : vector<256x64xf32>
    %2 = tpu.matmul %0, %1, %cst {dimension_numbers = #tpu.dot_dimension_numbers<[1], [0], [0], [1], [0, 0, 1, 1], [], []>} : vector<256x32xf32>, vector<32x64xf32>, vector<256x64xf32> -> vector<256x64xf32>
    %c0_3 = arith.constant 0 : index
    %c0_4 = arith.constant 0 : index
    %3 = vector.load %arg3[%c0_3, %c0_4] : memref<1x64xf32, #tpu.memory_space<vmem>>, vector<1x64xf32>
    %4 = vector.broadcast %3 : vector<1x64xf32> to vector<256x64xf32>
    %5 = arith.addf %2, %4 : vector<256x64xf32>
    %cst_5 = arith.constant 0.000000e+00 : f32
    %6 = vector.broadcast %cst_5 : f32 to vector<256x64xf32>
    %7 = arith.maximumf %5, %6 : vector<256x64xf32>
    %c0_6 = arith.constant 0 : index
    %c0_7 = arith.constant 0 : index
    %8 = vector.load %arg4[%c0_6, %c0_7] : memref<64x128xf32, #tpu.memory_space<vmem>>, vector<64x128xf32>
    %cst_8 = arith.constant dense<0.000000e+00> : vector<256x128xf32>
    %9 = tpu.matmul %7, %8, %cst_8 {dimension_numbers = #tpu.dot_dimension_numbers<[1], [0], [0], [1], [0, 0, 1, 1], [], []>} : vector<256x64xf32>, vector<64x128xf32>, vector<256x128xf32> -> vector<256x128xf32>
    %c0_9 = arith.constant 0 : index
    %c0_10 = arith.constant 0 : index
    %10 = vector.load %arg5[%c0_9, %c0_10] : memref<1x128xf32, #tpu.memory_space<vmem>>, vector<1x128xf32>
    %11 = vector.broadcast %10 : vector<1x128xf32> to vector<256x128xf32>
    %12 = arith.addf %9, %11 : vector<256x128xf32>
    %cst_11 = arith.constant 0.000000e+00 : f32
    %13 = vector.broadcast %cst_11 : f32 to vector<256x128xf32>
    %14 = arith.maximumf %12, %13 : vector<256x128xf32>
    %c0_12 = arith.constant 0 : index
    %c0_13 = arith.constant 0 : index
    %15 = vector.load %arg6[%c0_12, %c0_13] : memref<128x128xf32, #tpu.memory_space<vmem>>, vector<128x128xf32>
    %cst_14 = arith.constant dense<0.000000e+00> : vector<256x128xf32>
    %16 = tpu.matmul %14, %15, %cst_14 {dimension_numbers = #tpu.dot_dimension_numbers<[1], [0], [0], [1], [0, 0, 1, 1], [], []>} : vector<256x128xf32>, vector<128x128xf32>, vector<256x128xf32> -> vector<256x128xf32>
    %c0_15 = arith.constant 0 : index
    %c0_16 = arith.constant 0 : index
    %17 = vector.load %arg7[%c0_15, %c0_16] : memref<1x128xf32, #tpu.memory_space<vmem>>, vector<1x128xf32>
    %18 = vector.broadcast %17 : vector<1x128xf32> to vector<256x128xf32>
    %19 = arith.addf %16, %18 : vector<256x128xf32>
    %c0_17 = arith.constant 0 : index
    %c0_18 = arith.constant 0 : index
    %20 = vector.load %arg8[%c0_17, %c0_18] : memref<256x128xf32, #tpu.memory_space<vmem>>, vector<256x128xf32>
    tpu.vector_store %arg8[%c0_17, %c0_18], %19 {strides = array<i32>} : memref<256x128xf32, #tpu.memory_space<vmem>>, vector<256x128xf32>,
    return
  }
  func.func @transform_0(%arg0: i32) -> (i32, i32) {
    %c0_i32 = arith.constant 0 : i32
    %c0_i32_0 = arith.constant 0 : i32
    return %arg0, %c0_i32 : i32, i32
  }
  func.func @transform_1(%arg0: i32) -> (i32, i32) {
    %c0_i32 = arith.constant 0 : i32
    %c0_i32_0 = arith.constant 0 : i32
    %c0_i32_1 = arith.constant 0 : i32
    return %c0_i32, %c0_i32_0 : i32, i32
  }
  func.func @transform_2(%arg0: i32) -> (i32, i32) {
    %c0_i32 = arith.constant 0 : i32
    %c0_i32_0 = arith.constant 0 : i32
    %c0_i32_1 = arith.constant 0 : i32
    return %c0_i32, %c0_i32_0 : i32, i32
  }
  func.func @transform_3(%arg0: i32) -> (i32, i32) {
    %c0_i32 = arith.constant 0 : i32
    %c0_i32_0 = arith.constant 0 : i32
    %c0_i32_1 = arith.constant 0 : i32
    return %c0_i32, %c0_i32_0 : i32, i32
  }
  func.func @transform_4(%arg0: i32) -> (i32, i32) {
    %c0_i32 = arith.constant 0 : i32
    %c0_i32_0 = arith.constant 0 : i32
    %c0_i32_1 = arith.constant 0 : i32
    return %c0_i32, %c0_i32_0 : i32, i32
  }
  func.func @transform_5(%arg0: i32) -> (i32, i32) {
    %c0_i32 = arith.constant 0 : i32
    %c0_i32_0 = arith.constant 0 : i32
    %c0_i32_1 = arith.constant 0 : i32
    return %c0_i32, %c0_i32_0 : i32, i32
  }
  func.func @transform_6(%arg0: i32) -> (i32, i32) {
    %c0_i32 = arith.constant 0 : i32
    %c0_i32_0 = arith.constant 0 : i32
    %c0_i32_1 = arith.constant 0 : i32
    return %c0_i32, %c0_i32_0 : i32, i32
  }
  func.func @transform_7(%arg0: i32) -> (i32, i32) {
    %c0_i32 = arith.constant 0 : i32
    %c0_i32_0 = arith.constant 0 : i32
    return %arg0, %c0_i32 : i32, i32
  }
}

</mosaic_0001>

<llo_original>
// kernel: mlp_forward.1
$region0: #{mlp_forward.1}
  #allocation0 [shape = 'u32[]', space=smem, size = 0x4, offset = 0x4, fixed_abs, tag = 'smem constant byte address 0x4 - core index']
  #allocation1 [shape = 'u32[72,128]{1,0:T(1,128)}', space=vmem, size = 0x9000, scoped, tag = 'internal scratch']
  %s0 = inlined_call_operand.vmem [shape: f32[1024,32], index: 0, kind: input, shape index: {}]
  %s1 = inlined_call_operand.vmem [shape: f32[32,64], index: 1, kind: input, shape index: {}]
  %s2 = inlined_call_operand.vmem [shape: f32[1,64], index: 2, kind: input, shape index: {}]
  %s3 = inlined_call_operand.vmem [shape: f32[64,128], index: 3, kind: input, shape index: {}]
  %s4 = inlined_call_operand.vmem [shape: f32[1,128], index: 4, kind: input, shape index: {}]
  %s5 = inlined_call_operand.vmem [shape: f32[128,128], index: 5, kind: input, shape index: {}]
  %s6 = inlined_call_operand.vmem [shape: f32[1,128], index: 6, kind: input, shape index: {}]
  %s7 = inlined_call_operand.vmem [shape: f32[1024,128], index: 7, kind: output, shape index: {}]
  %s8 = sld [smem:[#allocation0]]
  $region61: #{mlp_forward.1} parent=0
    _
  %s10 = ssub.s32 1, %s8
  %s11 = scalar_select 0, %s10, %s8
  loop: start=0, step=1, limit=6
  $region2: #{mlp_forward.1} parent=0 // loop_pre_header
    _
  $region3: #{mlp_forward.1} parent=0 // loop_header
    %s13 = sphi 0, %s17
    %p14 = scmp.ge.s32.totalorder %s13, 6
    %s23 = sphi 0, %s25
    %s26 = sphi 0, %s23
    %s27 = sphi 0, %s26
    %s43 = sphi 0, %s27
    %s47 = sphi 0, %s47
    %s49 = sphi 0, %s47
    %s50 = sphi 0, %s49
    %s64 = sphi 0, %s50
    %s68 = sphi 0, %s68
    %s70 = sphi 0, %s68
    %s71 = sphi 0, %s70
    %s85 = sphi 0, %s71
    %s89 = sphi 0, %s89
    %s91 = sphi 0, %s89
    %s92 = sphi 0, %s91
    %s106 = sphi 0, %s92
    %s110 = sphi 0, %s110
    %s112 = sphi 0, %s110
    %s113 = sphi 0, %s112
    %s127 = sphi 0, %s113
    %s131 = sphi 0, %s131
    %s133 = sphi 0, %s131
    %s134 = sphi 0, %s133
    %s148 = sphi 0, %s134
    %s152 = sphi 0, %s152
    %s154 = sphi 0, %s152
    %s155 = sphi 0, %s154
    %s169 = sphi 0, %s155
    %s175 = sphi 0, %s177
    %s178 = sphi 0, %s175
    %s179 = sphi 0, %s178
    %s195 = sphi 0, %s179
  $region4: #{mlp_forward.1} parent=0 // loop_header_branch
    %16 = sbr.rel (%p14) target = $region8
  $region5: #{mlp_forward.1} parent=0 // loop_body
    %s18 = ssub.s32 %s13, 1
    %s19 = ssub.s32 %s13, 2
    %s20 = sadd.s32 %s13, 1
    %s21 = ssub.s32 %s13, %s20
    %p22 = scmp.eq.s32.totalorder %s21, 0
    %s24 = sadd.s32 %s23, 1
    %s25 = scalar_select %p22, %s23, %s24
    %p28 = pneg %p22
    %p29 = scmp.eq.s32.totalorder %s13, 3
    %p30 = por %p28, %p29
    %p31 = scmp.ne.s32.totalorder %s23, %s26
    %p32 = scmp.eq.s32.totalorder %s13, 0
    %p33 = por %p31, %p32
    %p34 = scmp.ne.s32.totalorder %s23, %s26
    %p35 = scmp.eq.s32.totalorder %s18, 3
    %p36 = por %p34, %p35
    %p37 = scmp.ne.s32.totalorder %s26, %s27
    %p38 = scmp.eq.s32.totalorder %s18, 0
    %p39 = por %p37, %p38
    %p40 = scmp.ne.s32.totalorder %s26, %s27
    %p41 = scmp.eq.s32.totalorder %s19, 3
    %p42 = por %p40, %p41
    %p44 = scmp.ne.s32.totalorder %s27, %s43
    %p45 = scmp.eq.s32.totalorder %s19, 0
    %p46 = por %p44, %p45
    %s48 = sadd.s32 %s47, 1
    %p51 = scmp.eq.s32.totalorder %s13, 3
    %p52 = scmp.ne.s32.totalorder %s47, %s49
    %p53 = scmp.eq.s32.totalorder %s13, 0
    %p54 = por %p52, %p53
    %p55 = scmp.ne.s32.totalorder %s47, %s49
    %p56 = scmp.eq.s32.totalorder %s18, 3
    %p57 = por %p55, %p56
    %p58 = scmp.ne.s32.totalorder %s49, %s50
    %p59 = scmp.eq.s32.totalorder %s18, 0
    %p60 = por %p58, %p59
    %p61 = scmp.ne.s32.totalorder %s49, %s50
    %p62 = scmp.eq.s32.totalorder %s19, 3
    %p63 = por %p61, %p62
    %p65 = scmp.ne.s32.totalorder %s50, %s64
    %p66 = scmp.eq.s32.totalorder %s19, 0
    %p67 = por %p65, %p66
    %s69 = sadd.s32 %s68, 1
    %p72 = scmp.eq.s32.totalorder %s13, 3
    %p73 = scmp.ne.s32.totalorder %s68, %s70
    %p74 = scmp.eq.s32.totalorder %s13, 0
    %p75 = por %p73, %p74
    %p76 = scmp.ne.s32.totalorder %s68, %s70
    %p77 = scmp.eq.s32.totalorder %s18, 3
    %p78 = por %p76, %p77
    %p79 = scmp.ne.s32.totalorder %s70, %s71
    %p80 = scmp.eq.s32.totalorder %s18, 0
    %p81 = por %p79, %p80
    %p82 = scmp.ne.s32.totalorder %s70, %s71
    %p83 = scmp.eq.s32.totalorder %s19, 3
    %p84 = por %p82, %p83
    %p86 = scmp.ne.s32.totalorder %s71, %s85
    %p87 = scmp.eq.s32.totalorder %s19, 0
    %p88 = por %p86, %p87
    %s90 = sadd.s32 %s89, 1
    %p93 = scmp.eq.s32.totalorder %s13, 3
    %p94 = scmp.ne.s32.totalorder %s89, %s91
    %p95 = scmp.eq.s32.totalorder %s13, 0
    %p96 = por %p94, %p95
    %p97 = scmp.ne.s32.totalorder %s89, %s91
    %p98 = scmp.eq.s32.totalorder %s18, 3
    %p99 = por %p97, %p98
    %p100 = scmp.ne.s32.totalorder %s91, %s92
    %p101 = scmp.eq.s32.totalorder %s18, 0
    %p102 = por %p100, %p101
    %p103 = scmp.ne.s32.totalorder %s91, %s92
    %p104 = scmp.eq.s32.totalorder %s19, 3
    %p105 = por %p103, %p104
    %p107 = scmp.ne.s32.totalorder %s92, %s106
    %p108 = scmp.eq.s32.totalorder %s19, 0
    %p109 = por %p107, %p108
    %s111 = sadd.s32 %s110, 1
    %p114 = scmp.eq.s32.totalorder %s13, 3
    %p115 = scmp.ne.s32.totalorder %s110, %s112
    %p116 = scmp.eq.s32.totalorder %s13, 0
    %p117 = por %p115, %p116
    %p118 = scmp.ne.s32.totalorder %s110, %s112
    %p119 = scmp.eq.s32.totalorder %s18, 3
    %p120 = por %p118, %p119
    %p121 = scmp.ne.s32.totalorder %s112, %s113
    %p122 = scmp.eq.s32.totalorder %s18, 0
    %p123 = por %p121, %p122
    %p124 = scmp.ne.s32.totalorder %s112, %s113
    %p125 = scmp.eq.s32.totalorder %s19, 3
    %p126 = por %p124, %p125
    %p128 = scmp.ne.s32.totalorder %s113, %s127
    %p129 = scmp.eq.s32.totalorder %s19, 0
    %p130 = por %p128, %p129
    %s132 = sadd.s32 %s131, 1
    %p135 = scmp.eq.s32.totalorder %s13, 3
    %p136 = scmp.ne.s32.totalorder %s131, %s133
    %p137 = scmp.eq.s32.totalorder %s13, 0
    %p138 = por %p136, %p137
    %p139 = scmp.ne.s32.totalorder %s131, %s133
    %p140 = scmp.eq.s32.totalorder %s18, 3
    %p141 = por %p139, %p140
    %p142 = scmp.ne.s32.totalorder %s133, %s134
    %p143 = scmp.eq.s32.totalorder %s18, 0
    %p144 = por %p142, %p143
    %p145 = scmp.ne.s32.totalorder %s133, %s134
    %p146 = scmp.eq.s32.totalorder %s19, 3
    %p147 = por %p145, %p146
    %p149 = scmp.ne.s32.totalorder %s134, %s148
    %p150 = scmp.eq.s32.totalorder %s19, 0
    %p151 = por %p149, %p150
    %s153 = sadd.s32 %s152, 1
    %p156 = scmp.eq.s32.totalorder %s13, 3
    %p157 = scmp.ne.s32.totalorder %s152, %s154
    %p158 = scmp.eq.s32.totalorder %s13, 0
    %p159 = por %p157, %p158
    %p160 = scmp.ne.s32.totalorder %s152, %s154
    %p161 = scmp.eq.s32.totalorder %s18, 3
    %p162 = por %p160, %p161
    %p163 = scmp.ne.s32.totalorder %s154, %s155
    %p164 = scmp.eq.s32.totalorder %s18, 0
    %p165 = por %p163, %p164
    %p166 = scmp.ne.s32.totalorder %s154, %s155
    %p167 = scmp.eq.s32.totalorder %s19, 3
    %p168 = por %p166, %p167
    %p170 = scmp.ne.s32.totalorder %s155, %s169
    %p171 = scmp.eq.s32.totalorder %s19, 0
    %p172 = por %p170, %p171
    %s173 = ssub.s32 %s13, %s20
    %p174 = scmp.eq.s32.totalorder %s173, 0
    %s176 = sadd.s32 %s175, 1
    %s177 = scalar_select %p174, %s175, %s176
    %p180 = pneg %p174
    %p181 = scmp.eq.s32.totalorder %s13, 3
    %p182 = por %p180, %p181
    %p183 = scmp.ne.s32.totalorder %s175, %s178
    %p184 = scmp.eq.s32.totalorder %s13, 0
    %p185 = por %p183, %p184
    %p186 = scmp.ne.s32.totalorder %s175, %s178
    %p187 = scmp.eq.s32.totalorder %s18, 3
    %p188 = por %p186, %p187
    %p189 = scmp.ne.s32.totalorder %s178, %s179
    %p190 = scmp.eq.s32.totalorder %s18, 0
    %p191 = por %p189, %p190
    %p192 = scmp.ne.s32.totalorder %s178, %s179
    %p193 = scmp.eq.s32.totalorder %s19, 3
    %p194 = por %p192, %p193
    %p196 = scmp.ne.s32.totalorder %s179, %s195
    %p197 = scmp.eq.s32.totalorder %s19, 0
    %p198 = por %p196, %p197
    %p199 = scmp.le.s32.totalorder 1, %s13
    %p200 = scmp.lt.s32.totalorder %s13, 5
    %p201 = pnand %p199, %p200
    %p202 = pneg %p201
    // Predicated region
    $region9: #{mlp_forward.1} parent=5 // pred_check
      _
    $region10: #{mlp_forward.1} parent=5 // pred_check_branch
      %204 = sbr.rel (%p201) target = $region12
    $region11: #{mlp_forward.1} parent=5 // pred_region
      %s205 = ssub.s32 %s13, 1
      // Predicated region
      $region13: #{mlp_forward.1} parent=11 // pred_check
        %p206 = pneg %p60
      $region14: #{mlp_forward.1} parent=11 // pred_check_branch
        %208 = sbr.rel (%p206) target = $region16
      $region15: #{mlp_forward.1} parent=11 // pred_region
        _
      $region16: #{mlp_forward.1} parent=11 // pred_fallthru
        _
      // Predicated region
      $region17: #{mlp_forward.1} parent=11 // pred_check
        %p209 = pneg %p81
      $region18: #{mlp_forward.1} parent=11 // pred_check_branch
        %211 = sbr.rel (%p209) target = $region20
      $region19: #{mlp_forward.1} parent=11 // pred_region
        _
      $region20: #{mlp_forward.1} parent=11 // pred_fallthru
        _
      // Predicated region
      $region21: #{mlp_forward.1} parent=11 // pred_check
        %p212 = pneg %p102
      $region22: #{mlp_forward.1} parent=11 // pred_check_branch
        %214 = sbr.rel (%p212) target = $region24
      $region23: #{mlp_forward.1} parent=11 // pred_region
        _
      $region24: #{mlp_forward.1} parent=11 // pred_fallthru
        _
      // Predicated region
      $region25: #{mlp_forward.1} parent=11 // pred_check
        %p215 = pneg %p123
      $region26: #{mlp_forward.1} parent=11 // pred_check_branch
        %217 = sbr.rel (%p215) target = $region28
      $region27: #{mlp_forward.1} parent=11 // pred_region
        _
      $region28: #{mlp_forward.1} parent=11 // pred_fallthru
        _
      // Predicated region
      $region29: #{mlp_forward.1} parent=11 // pred_check
        %p218 = pneg %p144
      $region30: #{mlp_forward.1} parent=11 // pred_check_branch
        %220 = sbr.rel (%p218) target = $region32
      $region31: #{mlp_forward.1} parent=11 // pred_region
        _
      $region32: #{mlp_forward.1} parent=11 // pred_fallthru
        _
      // Predicated region
      $region33: #{mlp_forward.1} parent=11 // pred_check
        %p221 = pneg %p165
      $region34: #{mlp_forward.1} parent=11 // pred_check_branch
        %223 = sbr.rel (%p221) target = $region36
      $region35: #{mlp_forward.1} parent=11 // pred_region
        _
      $region36: #{mlp_forward.1} parent=11 // pred_fallthru
        _
    $region12: #{mlp_forward.1} parent=5 // pred_fallthru
      _
    %p224 = scmp.lt.s32.totalorder %s13, 4
    // Predicated region
    $region37: #{mlp_forward.1} parent=5 // pred_check
      %p225 = pneg %p224
    $region38: #{mlp_forward.1} parent=5 // pred_check_branch
      %227 = sbr.rel (%p225) target = $region40
    $region39: #{mlp_forward.1} parent=5 // pred_region
      // Predicated region
      $region41: #{mlp_forward.1} parent=39 // pred_check
        %p228 = pneg %p33
      $region42: #{mlp_forward.1} parent=39 // pred_check_branch
        %230 = sbr.rel (%p228) target = $region44
      $region43: #{mlp_forward.1} parent=39 // pred_region
        %s231 = smul.u32 32, %s13
        %p232 = scmp.lt.s32.totalorder %s231, 127
        %s233 = scalar_select %p232, %s231, 127
        %s234 = smul.addr %s233, 8
        %s235 = scalar_lea.vmem %s0, %s234
        %s236 = smul.u32 32, %s13
      $region44: #{mlp_forward.1} parent=39 // pred_fallthru
        _
    $region40: #{mlp_forward.1} parent=5 // pred_fallthru
      _
    %p237 = scmp.le.s32.totalorder 1, %s13
    %p238 = scmp.lt.s32.totalorder %s13, 5
    %p239 = pnand %p237, %p238
    %p240 = pneg %p239
    // Predicated region
    $region45: #{mlp_forward.1} parent=5 // pred_check
      _
    $region46: #{mlp_forward.1} parent=5 // pred_check_branch
      %242 = sbr.rel (%p239) target = $region48
    $region47: #{mlp_forward.1} parent=5 // pred_region
      %s243 = ssub.s32 %s13, 1
      %s244 = smul.u32 32, %s18
      %p245 = scmp.lt.s32.totalorder %s244, 127
      %s246 = scalar_select %p245, %s244, 127
      %s247 = smul.addr %s246, 8
      %s248 = scalar_lea.vmem %s0, %s247
      %p249 = pneg %p39
      %p250 = pneg %p36
      %p251 = pneg %p60
      %p252 = pneg %p57
      %p253 = pneg %p81
      %p254 = pneg %p78
      %p255 = pneg %p102
      %p256 = pneg %p99
      %p257 = pneg %p123
      %p258 = pneg %p120
      %p259 = pneg %p144
      %p260 = pneg %p141
      %p261 = pneg %p165
      %p262 = pneg %p162
      %p263 = pneg %p191
      %p264 = pneg %p188
      %s265 = smul.u32 32, %s18
      %p266 = scmp.lt.s32.totalorder %s265, 127
      %s267 = scalar_select %p266, %s265, 127
      %s268 = smul.addr %s267, 8
      %s269 = scalar_lea.vmem %s7, %s268
      %s270 = smul.u32 32, %s18
      %p271 = scmp.lt.s32.totalorder %s270, 127
      %s272 = scalar_select %p271, %s270, 127
      %s273 = smul.addr %s272, 8
      %s274 = scalar_lea.vmem %s0, %s273
      %s275 = smul.u32 32, %s18
      %s276 = smul.u32 32, %s18
      %p277 = scmp.lt.s32.totalorder %s276, 127
      %s278 = scalar_select %p277, %s276, 127
      %s279 = smul.addr %s278, 8
      %s280 = scalar_lea.vmem %s7, %s279
      %s281 = smul.u32 32, %s18
      %v282 = vld [vmem:[%s274] sm:$0xff]
      %v283 = vld [vmem:[%s274 + $0x8] sm:$0xff]
      %v284 = vld [vmem:[%s274 + $0x10] sm:$0xff]
      %v285 = vld [vmem:[%s274 + $0x18] sm:$0xff]
      %v286 = vld [vmem:[%s274 + $0x20] sm:$0xff]
      %v287 = vld [vmem:[%s274 + $0x28] sm:$0xff]
      %v288 = vld [vmem:[%s274 + $0x30] sm:$0xff]
      %v289 = vld [vmem:[%s274 + $0x38] sm:$0xff]
      %v290 = vld [vmem:[%s274 + $0x40] sm:$0xff]
      %v291 = vld [vmem:[%s274 + $0x48] sm:$0xff]
      %v292 = vld [vmem:[%s274 + $0x50] sm:$0xff]
      %v293 = vld [vmem:[%s274 + $0x58] sm:$0xff]
      %v294 = vld [vmem:[%s274 + $0x60] sm:$0xff]
      %v295 = vld [vmem:[%s274 + $0x68] sm:$0xff]
      %v296 = vld [vmem:[%s274 + $0x70] sm:$0xff]
      %v297 = vld [vmem:[%s274 + $0x78] sm:$0xff]
      %v298 = vld [vmem:[%s274 + $0x80] sm:$0xff]
      %v299 = vld [vmem:[%s274 + $0x88] sm:$0xff]
      %v300 = vld [vmem:[%s274 + $0x90] sm:$0xff]
      %v301 = vld [vmem:[%s274 + $0x98] sm:$0xff]
      %v302 = vld [vmem:[%s274 + $0xa0] sm:$0xff]
      %v303 = vld [vmem:[%s274 + $0xa8] sm:$0xff]
      %v304 = vld [vmem:[%s274 + $0xb0] sm:$0xff]
      %v305 = vld [vmem:[%s274 + $0xb8] sm:$0xff]
      %v306 = vld [vmem:[%s274 + $0xc0] sm:$0xff]
      %v307 = vld [vmem:[%s274 + $0xc8] sm:$0xff]
      %v308 = vld [vmem:[%s274 + $0xd0] sm:$0xff]
      %v309 = vld [vmem:[%s274 + $0xd8] sm:$0xff]
      %v310 = vld [vmem:[%s274 + $0xe0] sm:$0xff]
      %v311 = vld [vmem:[%s274 + $0xe8] sm:$0xff]
      %v312 = vld [vmem:[%s274 + $0xf0] sm:$0xff]
      %v313 = vld [vmem:[%s274 + $0xf8] sm:$0xff]
      %v314 = vld [vmem:[%s1] sm:$0xff]
      %v315 = vld [vmem:[%s1 + $0x8] sm:$0xff]
      %v316 = vld [vmem:[%s1 + $0x10] sm:$0xff]
      %v317 = vld [vmem:[%s1 + $0x18] sm:$0xff]
      %v318 = vld [vmem:[%s2] sm:$0x1]
      %v320 = vperm.slane %v318, 0
      %vm322 = vcmask 261120
      %v324 = vsel %vm322, %v282, 0
      %v327 = vsel %vm322, %v283, 0
      %v330 = vsel %vm322, %v284, 0
      %v333 = vsel %vm322, %v285, 0
      %v336 = vsel %vm322, %v286, 0
      %v339 = vsel %vm322, %v287, 0
      %v342 = vsel %vm322, %v288, 0
      %v345 = vsel %vm322, %v289, 0
      %v348 = vsel %vm322, %v290, 0
      %v351 = vsel %vm322, %v291, 0
      %v354 = vsel %vm322, %v292, 0
      %v357 = vsel %vm322, %v293, 0
      %v360 = vsel %vm322, %v294, 0
      %v363 = vsel %vm322, %v295, 0
      %v366 = vsel %vm322, %v296, 0
      %v369 = vsel %vm322, %v297, 0
      %v372 = vsel %vm322, %v298, 0
      %v375 = vsel %vm322, %v299, 0
      %v378 = vsel %vm322, %v300, 0
      %v381 = vsel %vm322, %v301, 0
      %v384 = vsel %vm322, %v302, 0
      %v387 = vsel %vm322, %v303, 0
      %v390 = vsel %vm322, %v304, 0
      %v393 = vsel %vm322, %v305, 0
      %v396 = vsel %vm322, %v306, 0
      %v399 = vsel %vm322, %v307, 0
      %v402 = vsel %vm322, %v308, 0
      %v405 = vsel %vm322, %v309, 0
      %v408 = vsel %vm322, %v310, 0
      %v411 = vsel %vm322, %v311, 0
      %v414 = vsel %vm322, %v312, 0
      %v417 = vsel %vm322, %v313, 0
      %419 = vmatpush.msra.mxu0 0.0
      %420 = vmatpush.msra.mxu0 0.0
      %421 = vmatpush.msra.mxu0 0.0
      %422 = vmatpush.msra.mxu0 0.0
      %423 = vmatpush.msra.mxu0 0.0
      %424 = vmatpush.msra.mxu0 0.0
      %425 = vmatpush.msra.mxu0 0.0
      %426 = vmatpush.msra.mxu0 0.0
      %427 = vmatpush.msra.mxu0 0.0
      %428 = vmatpush.msra.mxu0 0.0
      %429 = vmatpush.msra.mxu0 0.0
      %430 = vmatpush.msra.mxu0 0.0
      %431 = vmatpush.msra.mxu0 %v317
      %432 = vmatpush.msra.mxu0 %v316
      %433 = vmatpush.msra.mxu0 %v315
      %434 = vmatpush.msra.mxu0 %v314
      %435 = vmatmul.f32.gmra.mxu0 %v324
      %v436 = vpop.f32.mrf.mxu0
      %v437 = vadd.f32 %v320, %v436
      %438 = vmatmul.f32.gmra.mxu0 %v327
      %v439 = vpop.f32.mrf.mxu0
      %v440 = vadd.f32 %v320, %v439
      %441 = vmatmul.f32.gmra.mxu0 %v330
      %v442 = vpop.f32.mrf.mxu0
      %v443 = vadd.f32 %v320, %v442
      %444 = vmatmul.f32.gmra.mxu0 %v333
      %v445 = vpop.f32.mrf.mxu0
      %v446 = vadd.f32 %v320, %v445
      %447 = vmatmul.f32.gmra.mxu0 %v336
      %v448 = vpop.f32.mrf.mxu0
      %v449 = vadd.f32 %v320, %v448
      %450 = vmatmul.f32.gmra.mxu0 %v339
      %v451 = vpop.f32.mrf.mxu0
      %v452 = vadd.f32 %v320, %v451
      %453 = vmatmul.f32.gmra.mxu0 %v342
      %v454 = vpop.f32.mrf.mxu0
      %v455 = vadd.f32 %v320, %v454
      %456 = vmatmul.f32.gmra.mxu0 %v345
      %v457 = vpop.f32.mrf.mxu0
      %v458 = vadd.f32 %v320, %v457
      %459 = vmatmul.f32.gmra.mxu0 %v348
      %v460 = vpop.f32.mrf.mxu0
      %v461 = vadd.f32 %v320, %v460
      %462 = vmatmul.f32.gmra.mxu0 %v351
      %v463 = vpop.f32.mrf.mxu0
      %v464 = vadd.f32 %v320, %v463
      %465 = vmatmul.f32.gmra.mxu0 %v354
      %v466 = vpop.f32.mrf.mxu0
      %v467 = vadd.f32 %v320, %v466
      %468 = vmatmul.f32.gmra.mxu0 %v357
      %v469 = vpop.f32.mrf.mxu0
      %v470 = vadd.f32 %v320, %v469
      %471 = vmatmul.f32.gmra.mxu0 %v360
      %v472 = vpop.f32.mrf.mxu0
      %v473 = vadd.f32 %v320, %v472
      %474 = vmatmul.f32.gmra.mxu0 %v363
      %v475 = vpop.f32.mrf.mxu0
      %v476 = vadd.f32 %v320, %v475
      %477 = vmatmul.f32.gmra.mxu0 %v366
      %v478 = vpop.f32.mrf.mxu0
      %v479 = vadd.f32 %v320, %v478
      %480 = vmatmul.f32.gmra.mxu0 %v369
      %v481 = vpop.f32.mrf.mxu0
      %v482 = vadd.f32 %v320, %v481
      %483 = vmatmul.f32.gmra.mxu0 %v372
      %v484 = vpop.f32.mrf.mxu0
      %v485 = vadd.f32 %v320, %v484
      %486 = vmatmul.f32.gmra.mxu0 %v375
      %v487 = vpop.f32.mrf.mxu0
      %v488 = vadd.f32 %v320, %v487
      %489 = vmatmul.f32.gmra.mxu0 %v378
      %v490 = vpop.f32.mrf.mxu0
      %v491 = vadd.f32 %v320, %v490
      %492 = vmatmul.f32.gmra.mxu0 %v381
      %v493 = vpop.f32.mrf.mxu0
      %v494 = vadd.f32 %v320, %v493
      %495 = vmatmul.f32.gmra.mxu0 %v384
      %v496 = vpop.f32.mrf.mxu0
      %v497 = vadd.f32 %v320, %v496
      %498 = vmatmul.f32.gmra.mxu0 %v387
      %v499 = vpop.f32.mrf.mxu0
      %v500 = vadd.f32 %v320, %v499
      %501 = vmatmul.f32.gmra.mxu0 %v390
      %v502 = vpop.f32.mrf.mxu0
      %v503 = vadd.f32 %v320, %v502
      %504 = vmatmul.f32.gmra.mxu0 %v393
      %v505 = vpop.f32.mrf.mxu0
      %v506 = vadd.f32 %v320, %v505
      %507 = vmatmul.f32.gmra.mxu0 %v396
      %v508 = vpop.f32.mrf.mxu0
      %v509 = vadd.f32 %v320, %v508
      %510 = vmatmul.f32.gmra.mxu0 %v399
      %v511 = vpop.f32.mrf.mxu0
      %v512 = vadd.f32 %v320, %v511
      %513 = vmatmul.f32.gmra.mxu0 %v402
      %v514 = vpop.f32.mrf.mxu0
      %v515 = vadd.f32 %v320, %v514
      %516 = vmatmul.f32.gmra.mxu0 %v405
      %v517 = vpop.f32.mrf.mxu0
      %v518 = vadd.f32 %v320, %v517
      %519 = vmatmul.f32.gmra.mxu0 %v408
      %v520 = vpop.f32.mrf.mxu0
      %v521 = vadd.f32 %v320, %v520
      %522 = vmatmul.f32.gmra.mxu0 %v411
      %v523 = vpop.f32.mrf.mxu0
      %v524 = vadd.f32 %v320, %v523
      %525 = vmatmul.f32.gmra.mxu0 %v414
      %v526 = vpop.f32.mrf.mxu0
      %v527 = vadd.f32 %v320, %v526
      %528 = vmatmul.f32.gmra.mxu0 %v417
      %v529 = vpop.f32.mrf.mxu0
      %v530 = vadd.f32 %v320, %v529
      %531 = vdwg.mxu0
      %v532 = vmax.f32 %v437, 0.0
      %v533 = vmax.f32 %v440, 0.0
      %v534 = vmax.f32 %v443, 0.0
      %v535 = vmax.f32 %v446, 0.0
      %v536 = vmax.f32 %v449, 0.0
      %v537 = vmax.f32 %v452, 0.0
      %v538 = vmax.f32 %v455, 0.0
      %v539 = vmax.f32 %v458, 0.0
      %v540 = vmax.f32 %v461, 0.0
      %v541 = vmax.f32 %v464, 0.0
      %v542 = vmax.f32 %v467, 0.0
      %v543 = vmax.f32 %v470, 0.0
      %v544 = vmax.f32 %v473, 0.0
      %v545 = vmax.f32 %v476, 0.0
      %v546 = vmax.f32 %v479, 0.0
      %v547 = vmax.f32 %v482, 0.0
      %v548 = vmax.f32 %v485, 0.0
      %v549 = vmax.f32 %v488, 0.0
      %v550 = vmax.f32 %v491, 0.0
      %v551 = vmax.f32 %v494, 0.0
      %v552 = vmax.f32 %v497, 0.0
      %v553 = vmax.f32 %v500, 0.0
      %v554 = vmax.f32 %v503, 0.0
      %v555 = vmax.f32 %v506, 0.0
      %v556 = vmax.f32 %v509, 0.0
      %v557 = vmax.f32 %v512, 0.0
      %v558 = vmax.f32 %v515, 0.0
      %v559 = vmax.f32 %v518, 0.0
      %v560 = vmax.f32 %v521, 0.0
      %v561 = vmax.f32 %v524, 0.0
      %v562 = vmax.f32 %v527, 0.0
      %v563 = vmax.f32 %v530, 0.0
      %v564 = vld [vmem:[%s3] sm:$0xff]
      %v565 = vld [vmem:[%s3 + $0x8] sm:$0xff]
      %v566 = vld [vmem:[%s3 + $0x10] sm:$0xff]
      %v567 = vld [vmem:[%s3 + $0x18] sm:$0xff]
      %v568 = vld [vmem:[%s3 + $0x20] sm:$0xff]
      %v569 = vld [vmem:[%s3 + $0x28] sm:$0xff]
      %v570 = vld [vmem:[%s3 + $0x30] sm:$0xff]
      %v571 = vld [vmem:[%s3 + $0x38] sm:$0xff]
      %v572 = vld [vmem:[%s4] sm:$0x1]
      %v574 = vperm.slane %v572, 0
      %vm576 = vcmask 523264
      %v578 = vsel %vm576, %v532, 0
      %v581 = vsel %vm576, %v533, 0
      %v584 = vsel %vm576, %v534, 0
      %v587 = vsel %vm576, %v535, 0
      %v590 = vsel %vm576, %v536, 0
      %v593 = vsel %vm576, %v537, 0
      %v596 = vsel %vm576, %v538, 0
      %v599 = vsel %vm576, %v539, 0
      %v602 = vsel %vm576, %v540, 0
      %v605 = vsel %vm576, %v541, 0
      %v608 = vsel %vm576, %v542, 0
      %v611 = vsel %vm576, %v543, 0
      %v614 = vsel %vm576, %v544, 0
      %v617 = vsel %vm576, %v545, 0
      %v620 = vsel %vm576, %v546, 0
      %v623 = vsel %vm576, %v547, 0
      %v626 = vsel %vm576, %v548, 0
      %v629 = vsel %vm576, %v549, 0
      %v632 = vsel %vm576, %v550, 0
      %v635 = vsel %vm576, %v551, 0
      %v638 = vsel %vm576, %v552, 0
      %v641 = vsel %vm576, %v553, 0
      %v644 = vsel %vm576, %v554, 0
      %v647 = vsel %vm576, %v555, 0
      %v650 = vsel %vm576, %v556, 0
      %v653 = vsel %vm576, %v557, 0
      %v656 = vsel %vm576, %v558, 0
      %v659 = vsel %vm576, %v559, 0
      %v662 = vsel %vm576, %v560, 0
      %v665 = vsel %vm576, %v561, 0
      %v668 = vsel %vm576, %v562, 0
      %v671 = vsel %vm576, %v563, 0
      %673 = vmatpush.msra.mxu0 0.0
      %674 = vmatpush.msra.mxu0 0.0
      %675 = vmatpush.msra.mxu0 0.0
      %676 = vmatpush.msra.mxu0 0.0
      %677 = vmatpush.msra.mxu0 0.0
      %678 = vmatpush.msra.mxu0 0.0
      %679 = vmatpush.msra.mxu0 0.0
      %680 = vmatpush.msra.mxu0 0.0
      %681 = vmatpush.msra.mxu0 %v571
      %682 = vmatpush.msra.mxu0 %v570
      %683 = vmatpush.msra.mxu0 %v569
      %684 = vmatpush.msra.mxu0 %v568
      %685 = vmatpush.msra.mxu0 %v567
      %686 = vmatpush.msra.mxu0 %v566
      %687 = vmatpush.msra.mxu0 %v565
      %688 = vmatpush.msra.mxu0 %v564
      %689 = vmatmul.f32.gmra.mxu0 %v578
      %v690 = vpop.f32.mrf.mxu0
      %v691 = vadd.f32 %v574, %v690
      %692 = vmatmul.f32.gmra.mxu0 %v581
      %v693 = vpop.f32.mrf.mxu0
      %v694 = vadd.f32 %v574, %v693
      %695 = vmatmul.f32.gmra.mxu0 %v584
      %v696 = vpop.f32.mrf.mxu0
      %v697 = vadd.f32 %v574, %v696
      %698 = vmatmul.f32.gmra.mxu0 %v587
      %v699 = vpop.f32.mrf.mxu0
      %v700 = vadd.f32 %v574, %v699
      %701 = vmatmul.f32.gmra.mxu0 %v590
      %v702 = vpop.f32.mrf.mxu0
      %v703 = vadd.f32 %v574, %v702
      %704 = vmatmul.f32.gmra.mxu0 %v593
      %v705 = vpop.f32.mrf.mxu0
      %v706 = vadd.f32 %v574, %v705
      %707 = vmatmul.f32.gmra.mxu0 %v596
      %v708 = vpop.f32.mrf.mxu0
      %v709 = vadd.f32 %v574, %v708
      %710 = vmatmul.f32.gmra.mxu0 %v599
      %v711 = vpop.f32.mrf.mxu0
      %v712 = vadd.f32 %v574, %v711
      %713 = vmatmul.f32.gmra.mxu0 %v602
      %v714 = vpop.f32.mrf.mxu0
      %v715 = vadd.f32 %v574, %v714
      %716 = vmatmul.f32.gmra.mxu0 %v605
      %v717 = vpop.f32.mrf.mxu0
      %v718 = vadd.f32 %v574, %v717
      %719 = vmatmul.f32.gmra.mxu0 %v608
      %v720 = vpop.f32.mrf.mxu0
      %v721 = vadd.f32 %v574, %v720
      %722 = vmatmul.f32.gmra.mxu0 %v611
      %v723 = vpop.f32.mrf.mxu0
      %v724 = vadd.f32 %v574, %v723
      %725 = vmatmul.f32.gmra.mxu0 %v614
      %v726 = vpop.f32.mrf.mxu0
      %v727 = vadd.f32 %v574, %v726
      %728 = vmatmul.f32.gmra.mxu0 %v617
      %v729 = vpop.f32.mrf.mxu0
      %v730 = vadd.f32 %v574, %v729
      %731 = vmatmul.f32.gmra.mxu0 %v620
      %v732 = vpop.f32.mrf.mxu0
      %v733 = vadd.f32 %v574, %v732
      %734 = vmatmul.f32.gmra.mxu0 %v623
      %v735 = vpop.f32.mrf.mxu0
      %v736 = vadd.f32 %v574, %v735
      %737 = vmatmul.f32.gmra.mxu0 %v626
      %v738 = vpop.f32.mrf.mxu0
      %v739 = vadd.f32 %v574, %v738
      %740 = vmatmul.f32.gmra.mxu0 %v629
      %v741 = vpop.f32.mrf.mxu0
      %v742 = vadd.f32 %v574, %v741
      %743 = vmatmul.f32.gmra.mxu0 %v632
      %v744 = vpop.f32.mrf.mxu0
      %v745 = vadd.f32 %v574, %v744
      %746 = vmatmul.f32.gmra.mxu0 %v635
      %v747 = vpop.f32.mrf.mxu0
      %v748 = vadd.f32 %v574, %v747
      %749 = vmatmul.f32.gmra.mxu0 %v638
      %v750 = vpop.f32.mrf.mxu0
      %v751 = vadd.f32 %v574, %v750
      %752 = vmatmul.f32.gmra.mxu0 %v641
      %v753 = vpop.f32.mrf.mxu0
      %v754 = vadd.f32 %v574, %v753
      %755 = vmatmul.f32.gmra.mxu0 %v644
      %v756 = vpop.f32.mrf.mxu0
      %v757 = vadd.f32 %v574, %v756
      %758 = vmatmul.f32.gmra.mxu0 %v647
      %v759 = vpop.f32.mrf.mxu0
      %v760 = vadd.f32 %v574, %v759
      %761 = vmatmul.f32.gmra.mxu0 %v650
      %v762 = vpop.f32.mrf.mxu0
      %v763 = vadd.f32 %v574, %v762
      %764 = vmatmul.f32.gmra.mxu0 %v653
      %v765 = vpop.f32.mrf.mxu0
      %v766 = vadd.f32 %v574, %v765
      %767 = vmatmul.f32.gmra.mxu0 %v656
      %v768 = vpop.f32.mrf.mxu0
      %v769 = vadd.f32 %v574, %v768
      %770 = vmatmul.f32.gmra.mxu0 %v659
      %v771 = vpop.f32.mrf.mxu0
      %v772 = vadd.f32 %v574, %v771
      %773 = vmatmul.f32.gmra.mxu0 %v662
      %v774 = vpop.f32.mrf.mxu0
      %v775 = vadd.f32 %v574, %v774
      %776 = vmatmul.f32.gmra.mxu0 %v665
      %v777 = vpop.f32.mrf.mxu0
      %v778 = vadd.f32 %v574, %v777
      %779 = vmatmul.f32.gmra.mxu0 %v668
      %v780 = vpop.f32.mrf.mxu0
      %v781 = vadd.f32 %v574, %v780
      %782 = vmatmul.f32.gmra.mxu0 %v671
      %v783 = vpop.f32.mrf.mxu0
      %v784 = vadd.f32 %v574, %v783
      %785 = vdwg.mxu0
      %v786 = vmax.f32 %v691, 0.0
      %v787 = vmax.f32 %v694, 0.0
      %v788 = vmax.f32 %v697, 0.0
      %v789 = vmax.f32 %v700, 0.0
      %v790 = vmax.f32 %v703, 0.0
      %v791 = vmax.f32 %v706, 0.0
      %v792 = vmax.f32 %v709, 0.0
      %v793 = vmax.f32 %v712, 0.0
      %v794 = vmax.f32 %v715, 0.0
      %v795 = vmax.f32 %v718, 0.0
      %v796 = vmax.f32 %v721, 0.0
      %v797 = vmax.f32 %v724, 0.0
      %v798 = vmax.f32 %v727, 0.0
      %v799 = vmax.f32 %v730, 0.0
      %v800 = vmax.f32 %v733, 0.0
      %v801 = vmax.f32 %v736, 0.0
      %v802 = vmax.f32 %v739, 0.0
      %v803 = vmax.f32 %v742, 0.0
      %v804 = vmax.f32 %v745, 0.0
      %v805 = vmax.f32 %v748, 0.0
      %v806 = vmax.f32 %v751, 0.0
      %v807 = vmax.f32 %v754, 0.0
      %v808 = vmax.f32 %v757, 0.0
      %v809 = vmax.f32 %v760, 0.0
      %v810 = vmax.f32 %v763, 0.0
      %v811 = vmax.f32 %v766, 0.0
      %v812 = vmax.f32 %v769, 0.0
      %v813 = vmax.f32 %v772, 0.0
      %v814 = vmax.f32 %v775, 0.0
      %v815 = vmax.f32 %v778, 0.0
      %v816 = vmax.f32 %v781, 0.0
      %v817 = vmax.f32 %v784, 0.0
      %v818 = vld [vmem:[%s5] sm:$0xff]
      %v819 = vld [vmem:[%s5 + $0x8] sm:$0xff]
      %v820 = vld [vmem:[%s5 + $0x10] sm:$0xff]
      %v821 = vld [vmem:[%s5 + $0x18] sm:$0xff]
      %v822 = vld [vmem:[%s5 + $0x20] sm:$0xff]
      %v823 = vld [vmem:[%s5 + $0x28] sm:$0xff]
      %v824 = vld [vmem:[%s5 + $0x30] sm:$0xff]
      %v825 = vld [vmem:[%s5 + $0x38] sm:$0xff]
      %v826 = vld [vmem:[%s5 + $0x40] sm:$0xff]
      %v827 = vld [vmem:[%s5 + $0x48] sm:$0xff]
      %v828 = vld [vmem:[%s5 + $0x50] sm:$0xff]
      %v829 = vld [vmem:[%s5 + $0x58] sm:$0xff]
      %v830 = vld [vmem:[%s5 + $0x60] sm:$0xff]
      %v831 = vld [vmem:[%s5 + $0x68] sm:$0xff]
      %v832 = vld [vmem:[%s5 + $0x70] sm:$0xff]
      %v833 = vld [vmem:[%s5 + $0x78] sm:$0xff]
      %v834 = vld [vmem:[%s6] sm:$0x1]
      %v836 = vperm.slane %v834, 0
      %838 = vmatpush.msra.mxu0 %v833
      %839 = vmatpush.msra.mxu0 %v832
      %840 = vmatpush.msra.mxu0 %v831
      %841 = vmatpush.msra.mxu0 %v830
      %842 = vmatpush.msra.mxu0 %v829
      %843 = vmatpush.msra.mxu0 %v828
      %844 = vmatpush.msra.mxu0 %v827
      %845 = vmatpush.msra.mxu0 %v826
      %846 = vmatpush.msra.mxu0 %v825
      %847 = vmatpush.msra.mxu0 %v824
      %848 = vmatpush.msra.mxu0 %v823
      %849 = vmatpush.msra.mxu0 %v822
      %850 = vmatpush.msra.mxu0 %v821
      %851 = vmatpush.msra.mxu0 %v820
      %852 = vmatpush.msra.mxu0 %v819
      %853 = vmatpush.msra.mxu0 %v818
      %854 = vmatmul.f32.gmra.mxu0 %v786
      %v855 = vpop.f32.mrf.mxu0
      %v856 = vadd.f32 %v836, %v855
      %857 = vmatmul.f32.gmra.mxu0 %v787
      %v858 = vpop.f32.mrf.mxu0
      %v859 = vadd.f32 %v836, %v858
      %860 = vmatmul.f32.gmra.mxu0 %v788
      %v861 = vpop.f32.mrf.mxu0
      %v862 = vadd.f32 %v836, %v861
      %863 = vmatmul.f32.gmra.mxu0 %v789
      %v864 = vpop.f32.mrf.mxu0
      %v865 = vadd.f32 %v836, %v864
      %866 = vmatmul.f32.gmra.mxu0 %v790
      %v867 = vpop.f32.mrf.mxu0
      %v868 = vadd.f32 %v836, %v867
      %869 = vmatmul.f32.gmra.mxu0 %v791
      %v870 = vpop.f32.mrf.mxu0
      %v871 = vadd.f32 %v836, %v870
      %872 = vmatmul.f32.gmra.mxu0 %v792
      %v873 = vpop.f32.mrf.mxu0
      %v874 = vadd.f32 %v836, %v873
      %875 = vmatmul.f32.gmra.mxu0 %v793
      %v876 = vpop.f32.mrf.mxu0
      %v877 = vadd.f32 %v836, %v876
      %878 = vmatmul.f32.gmra.mxu0 %v794
      %v879 = vpop.f32.mrf.mxu0
      %v880 = vadd.f32 %v836, %v879
      %881 = vmatmul.f32.gmra.mxu0 %v795
      %v882 = vpop.f32.mrf.mxu0
      %v883 = vadd.f32 %v836, %v882
      %884 = vmatmul.f32.gmra.mxu0 %v796
      %v885 = vpop.f32.mrf.mxu0
      %v886 = vadd.f32 %v836, %v885
      %887 = vmatmul.f32.gmra.mxu0 %v797
      %v888 = vpop.f32.mrf.mxu0
      %v889 = vadd.f32 %v836, %v888
      %890 = vmatmul.f32.gmra.mxu0 %v798
      %v891 = vpop.f32.mrf.mxu0
      %v892 = vadd.f32 %v836, %v891
      %893 = vmatmul.f32.gmra.mxu0 %v799
      %v894 = vpop.f32.mrf.mxu0
      %v895 = vadd.f32 %v836, %v894
      %896 = vmatmul.f32.gmra.mxu0 %v800
      %v897 = vpop.f32.mrf.mxu0
      %v898 = vadd.f32 %v836, %v897
      %899 = vmatmul.f32.gmra.mxu0 %v801
      %v900 = vpop.f32.mrf.mxu0
      %v901 = vadd.f32 %v836, %v900
      %902 = vmatmul.f32.gmra.mxu0 %v802
      %v903 = vpop.f32.mrf.mxu0
      %v904 = vadd.f32 %v836, %v903
      %905 = vmatmul.f32.gmra.mxu0 %v803
      %v906 = vpop.f32.mrf.mxu0
      %v907 = vadd.f32 %v836, %v906
      %908 = vmatmul.f32.gmra.mxu0 %v804
      %v909 = vpop.f32.mrf.mxu0
      %v910 = vadd.f32 %v836, %v909
      %911 = vmatmul.f32.gmra.mxu0 %v805
      %v912 = vpop.f32.mrf.mxu0
      %v913 = vadd.f32 %v836, %v912
      %914 = vmatmul.f32.gmra.mxu0 %v806
      %v915 = vpop.f32.mrf.mxu0
      %v916 = vadd.f32 %v836, %v915
      %917 = vmatmul.f32.gmra.mxu0 %v807
      %v918 = vpop.f32.mrf.mxu0
      %v919 = vadd.f32 %v836, %v918
      %920 = vmatmul.f32.gmra.mxu0 %v808
      %v921 = vpop.f32.mrf.mxu0
      %v922 = vadd.f32 %v836, %v921
      %923 = vmatmul.f32.gmra.mxu0 %v809
      %v924 = vpop.f32.mrf.mxu0
      %v925 = vadd.f32 %v836, %v924
      %926 = vmatmul.f32.gmra.mxu0 %v810
      %v927 = vpop.f32.mrf.mxu0
      %v928 = vadd.f32 %v836, %v927
      %929 = vmatmul.f32.gmra.mxu0 %v811
      %v930 = vpop.f32.mrf.mxu0
      %v931 = vadd.f32 %v836, %v930
      %932 = vmatmul.f32.gmra.mxu0 %v812
      %v933 = vpop.f32.mrf.mxu0
      %v934 = vadd.f32 %v836, %v933
      %935 = vmatmul.f32.gmra.mxu0 %v813
      %v936 = vpop.f32.mrf.mxu0
      %v937 = vadd.f32 %v836, %v936
      %938 = vmatmul.f32.gmra.mxu0 %v814
      %v939 = vpop.f32.mrf.mxu0
      %v940 = vadd.f32 %v836, %v939
      %941 = vmatmul.f32.gmra.mxu0 %v815
      %v942 = vpop.f32.mrf.mxu0
      %v943 = vadd.f32 %v836, %v942
      %944 = vmatmul.f32.gmra.mxu0 %v816
      %v945 = vpop.f32.mrf.mxu0
      %v946 = vadd.f32 %v836, %v945
      %947 = vmatmul.f32.gmra.mxu0 %v817
      %v948 = vpop.f32.mrf.mxu0
      %v949 = vadd.f32 %v836, %v948
      %950 = vdwg.mxu0
      %951 = vst [vmem:[%s280] sm:$0xff] %v856
      %952 = vst [vmem:[%s280 + $0x8] sm:$0xff] %v859
      %953 = vst [vmem:[%s280 + $0x10] sm:$0xff] %v862
      %954 = vst [vmem:[%s280 + $0x18] sm:$0xff] %v865
      %955 = vst [vmem:[%s280 + $0x20] sm:$0xff] %v868
      %956 = vst [vmem:[%s280 + $0x28] sm:$0xff] %v871
      %957 = vst [vmem:[%s280 + $0x30] sm:$0xff] %v874
      %958 = vst [vmem:[%s280 + $0x38] sm:$0xff] %v877
      %959 = vst [vmem:[%s280 + $0x40] sm:$0xff] %v880
      %960 = vst [vmem:[%s280 + $0x48] sm:$0xff] %v883
      %961 = vst [vmem:[%s280 + $0x50] sm:$0xff] %v886
      %962 = vst [vmem:[%s280 + $0x58] sm:$0xff] %v889
      %963 = vst [vmem:[%s280 + $0x60] sm:$0xff] %v892
      %964 = vst [vmem:[%s280 + $0x68] sm:$0xff] %v895
      %965 = vst [vmem:[%s280 + $0x70] sm:$0xff] %v898
      %966 = vst [vmem:[%s280 + $0x78] sm:$0xff] %v901
      %967 = vst [vmem:[%s280 + $0x80] sm:$0xff] %v904
      %968 = vst [vmem:[%s280 + $0x88] sm:$0xff] %v907
      %969 = vst [vmem:[%s280 + $0x90] sm:$0xff] %v910
      %970 = vst [vmem:[%s280 + $0x98] sm:$0xff] %v913
      %971 = vst [vmem:[%s280 + $0xa0] sm:$0xff] %v916
      %972 = vst [vmem:[%s280 + $0xa8] sm:$0xff] %v919
      %973 = vst [vmem:[%s280 + $0xb0] sm:$0xff] %v922
      %974 = vst [vmem:[%s280 + $0xb8] sm:$0xff] %v925
      %975 = vst [vmem:[%s280 + $0xc0] sm:$0xff] %v928
      %976 = vst [vmem:[%s280 + $0xc8] sm:$0xff] %v931
      %977 = vst [vmem:[%s280 + $0xd0] sm:$0xff] %v934
      %978 = vst [vmem:[%s280 + $0xd8] sm:$0xff] %v937
      %979 = vst [vmem:[%s280 + $0xe0] sm:$0xff] %v940
      %980 = vst [vmem:[%s280 + $0xe8] sm:$0xff] %v943
      %981 = vst [vmem:[%s280 + $0xf0] sm:$0xff] %v946
      %982 = vst [vmem:[%s280 + $0xf8] sm:$0xff] %v949
      %s983 = smul.u32 32, %s18
      %p984 = scmp.lt.s32.totalorder %s983, 127
      %s985 = scalar_select %p984, %s983, 127
      %s986 = smul.addr %s985, 8
      %s987 = scalar_lea.vmem %s7, %s986
      // Predicated region
      $region49: #{mlp_forward.1} parent=47 // pred_check
        %p988 = pneg %p188
      $region50: #{mlp_forward.1} parent=47 // pred_check_branch
        %990 = sbr.rel (%p988) target = $region52
      $region51: #{mlp_forward.1} parent=47 // pred_region
        %s991 = smul.u32 32, %s18
      $region52: #{mlp_forward.1} parent=47 // pred_fallthru
        _
    $region48: #{mlp_forward.1} parent=5 // pred_fallthru
      _
    %p992 = scmp.le.s32.totalorder 2, %s13
    // Predicated region
    $region53: #{mlp_forward.1} parent=5 // pred_check
      %p993 = pneg %p992
    $region54: #{mlp_forward.1} parent=5 // pred_check_branch
      %995 = sbr.rel (%p993) target = $region56
    $region55: #{mlp_forward.1} parent=5 // pred_region
      %s996 = ssub.s32 %s13, 2
      // Predicated region
      $region57: #{mlp_forward.1} parent=55 // pred_check
        %p997 = pneg %p194
      $region58: #{mlp_forward.1} parent=55 // pred_check_branch
        %999 = sbr.rel (%p997) target = $region60
      $region59: #{mlp_forward.1} parent=55 // pred_region
        %s1000 = smul.u32 32, %s19
        %p1001 = scmp.lt.s32.totalorder %s1000, 127
        %s1002 = scalar_select %p1001, %s1000, 127
        %s1003 = smul.addr %s1002, 8
        %s1004 = scalar_lea.vmem %s7, %s1003
      $region60: #{mlp_forward.1} parent=55 // pred_fallthru
        _
    $region56: #{mlp_forward.1} parent=5 // pred_fallthru
      _
  $region6: #{mlp_forward.1} parent=0 // loop_footer
    %s17 = sadd.s32 1, %s13
  $region7: #{mlp_forward.1} parent=0 // loop_footer_branch
    %12 = sbr.rel target = $region3
  $region8: #{mlp_forward.1} parent=0 // loop_exit
    _

</llo_original>
